<compile_context>
chip_gen: v7x
topology: tpu7x:2x2x1
jax: 0.10.0
libtpu: 0.0.40
codegen_flags: <defaults>
</compile_context>

<pallas_src>
import functools

import jax
import jax.numpy as jnp
from jax.experimental import pallas as pl
from jax.experimental.pallas import tpu as pltpu


def _round_up(a, m):
    return ((a + m - 1) // m) * m


def _k_exp_kernel_bcast_y(y_row_ref, x_ref, p_ref, o_ref, *, scale):
    # y_row_ref: (1, C) ; x_ref: (R, C) ; p_ref: (C, 128) ; o_ref: (R, 128)
    d = x_ref[...] - y_row_ref[...]                       # sublane-broadcast of y row
    sq = jnp.dot(d * d, p_ref[...],
                 preferred_element_type=jnp.float32,
                 precision=jax.lax.Precision.HIGHEST)     # (R, 128): per-point sum_d (d/sigma)^2
    o_ref[...] = (scale * jnp.exp(-jnp.sqrt(sq))).astype(o_ref.dtype)


def _k_exp_kernel_pair(x_ref, y_ref, p_ref, o_ref, *, scale):
    # x_ref, y_ref: (R, C) ; p_ref: (C, 128) ; o_ref: (R, 128)
    d = y_ref[...] - x_ref[...]
    sq = jnp.dot(d * d, p_ref[...],
                 preferred_element_type=jnp.float32,
                 precision=jax.lax.Precision.HIGHEST)
    o_ref[...] = (scale * jnp.exp(-jnp.sqrt(sq))).astype(o_ref.dtype)


def k_exp_forward(x, y, scale, sigma, *, block_rows=None,
                  target_vmem_bytes=20 << 20, out_dtype=jnp.float32):
    """Pallas implementation of K_exp.forward.

    x: (..., D) float; y: scalar (default 0), single point, or tensor broadcastable
    to x's shape; scale: python float; sigma: (D,).  Returns (...,) out_dtype.
    """
    x = jnp.asarray(x, jnp.float32)
    D = x.shape[-1]
    lead_shape = x.shape[:-1]

    n = 1
    for s in lead_shape:
        n *= s

    sigma = jnp.asarray(sigma, jnp.float32).reshape(D)
    inv_sigma_sq = (1.0 / sigma) ** 2

    C = 128 * D                      # flat elements per VMEM row = 128 points
    n_pad = max(128, _round_up(n, 128))
    nrows = n_pad // 128

    # Constant reduction/compaction matrix: out[:, j] = sum_k sq[:, k] * P[k, j].
    k_idx = jnp.arange(C)
    P = jnp.where((k_idx[:, None] // D) == jnp.arange(128)[None, :],
                  inv_sigma_sq[k_idx % D][:, None], 0.0).astype(jnp.float32)

    # Free reshape (no transpose pass): natural (..., D) row-major layout kept as-is.
    x_flat = x.reshape(n * D)
    if n_pad != n:                   # only in the ragged case (one small pad copy)
        x_flat = jnp.pad(x_flat, (0, (n_pad - n) * D))
    x2 = x_flat.reshape(nrows, C)

    y_arr = jnp.asarray(y, jnp.float32)
    scalar_y = y_arr.size == 1
    single_point_y = (not scalar_y and y_arr.size == D
                      and y_arr.ndim >= 1 and y_arr.shape[-1] == D)

    if scalar_y:
        y_row = jnp.broadcast_to(y_arr.reshape(()), (1, C)).astype(jnp.float32)
        pair = False
    elif single_point_y:
        y_row = jnp.tile(y_arr.reshape(1, D), (1, 128)).astype(jnp.float32)
        pair = False
    else:
        # Genuinely full-size y (discretize(use_symmetry=False)); same free reshape.
        # TODO(synk): partially-broadcast y (neither scalar/point nor full) still
        # materializes the broadcast here.
        y_full = jnp.broadcast_to(y_arr, x.shape).astype(jnp.float32).reshape(n * D)
        if n_pad != n:
            y_full = jnp.pad(y_full, (0, (n_pad - n) * D))
        y2 = y_full.reshape(nrows, C)
        pair = True

    # Block sizing from the actual (dense) double-buffered footprint.
    per_row_bytes = 2 * 4 * (C + (C if pair else 0) + 128)   # x (+y) + out, 2 buffers
    if block_rows is None:
        r = max(8, (target_vmem_bytes // per_row_bytes) // 8 * 8)
        # Keep >= 2 grid steps when there is enough work (v7x megacore).
        r = min(r, max(8, _round_up(pl.cdiv(nrows, 2), 8)))
    else:
        r = block_rows
    if r >= nrows:
        r = nrows                     # single full block (block == full array dims)
    grid_n = pl.cdiv(nrows, r)

    vmem_limit = int(per_row_bytes * r + 4 * (C * 128 * 4 + C * 4) + (4 << 20))

    x_spec = pl.BlockSpec((r, C), lambda i: (i, 0))
    p_spec = pl.BlockSpec((C, 128), lambda i: (0, 0))
    out_spec = pl.BlockSpec((r, 128), lambda i: (i, 0))
    out_shape = jax.ShapeDtypeStruct((nrows, 128), out_dtype)
    cparams = pltpu.CompilerParams(dimension_semantics=("parallel",),
                                   vmem_limit_bytes=vmem_limit)

    if not pair:
        y_spec = pl.BlockSpec((1, C), lambda i: (0, 0))
        out = pl.pallas_call(
            functools.partial(_k_exp_kernel_bcast_y, scale=float(scale)),
            out_shape=out_shape,
            grid_spec=pltpu.PrefetchScalarGridSpec(
                num_scalar_prefetch=0,
                grid=(grid_n,),
                in_specs=[y_spec, x_spec, p_spec],
                out_specs=out_spec),
            compiler_params=cparams,
        )(y_row, x2, P)
    else:
        out = pl.pallas_call(
            functools.partial(_k_exp_kernel_pair, scale=float(scale)),
            out_shape=out_shape,
            grid_spec=pltpu.PrefetchScalarGridSpec(
                num_scalar_prefetch=0,
                grid=(grid_n,),
                in_specs=[x_spec, x_spec, p_spec],
                out_specs=out_spec),
            compiler_params=cparams,
        )(x2, y2, P)

    out_flat = out.reshape(nrows * 128)
    if n_pad != n:
        out_flat = out_flat[:n]
    return out_flat.reshape(lead_shape)


def k_exp_reference(x, y, scale, sigma):
    z = jnp.abs(jnp.asarray(y, jnp.float32) - jnp.asarray(x, jnp.float32))
    return scale * jnp.exp(-jnp.linalg.norm(z / sigma, axis=-1))


if __name__ == "__main__":
    key = jax.random.PRNGKey(0)
    k1, k2, k3 = jax.random.split(key, 3)

    scale = 1.5

    # 1) Default scalar y = 0 (K_exp.forward default / discretize(use_symmetry=True)).
    D = 2
    sigma2 = jnp.array([0.7, 1.3], dtype=jnp.float32)
    x = jax.random.normal(k1, (2, 16, 16, D), dtype=jnp.float32)   # 512 points, D=2
    out = jax.block_until_ready(k_exp_forward(x, 0.0, scale, sigma2))
    ref = k_exp_reference(x, 0.0, scale, sigma2)
    assert out.shape == x.shape[:-1], (out.shape, x.shape[:-1])
    assert jnp.allclose(out, ref, atol=1e-5, rtol=1e-4), float(jnp.max(jnp.abs(out - ref)))

    # 2) Full-tensor y (discretize(use_symmetry=False)).
    y = jax.random.normal(k2, (2, 16, 16, D), dtype=jnp.float32)
    out2 = jax.block_until_ready(k_exp_forward(x, y, scale, sigma2))
    ref2 = k_exp_reference(x, y, scale, sigma2)
    assert out2.shape == x.shape[:-1]
    assert jnp.allclose(out2, ref2, atol=1e-5, rtol=1e-4), float(jnp.max(jnp.abs(out2 - ref2)))

    # 3) Single-point y (broadcast in-kernel, no N x D y tensor materialized).
    y_pt = jnp.array([0.3, -0.2], dtype=jnp.float32)
    out3 = jax.block_until_ready(k_exp_forward(x, y_pt, scale, sigma2))
    ref3 = k_exp_reference(x, y_pt, scale, sigma2)
    assert jnp.allclose(out3, ref3, atol=1e-5, rtol=1e-4), float(jnp.max(jnp.abs(out3 - ref3)))

    # 4) Non-128-aligned point count and D=3 (general-D path, 105 points).
    sigma3 = jnp.array([0.6, 1.1, 0.9], dtype=jnp.float32)
    x3 = jax.random.normal(k3, (5, 7, 3, 3), dtype=jnp.float32)
    out4 = jax.block_until_ready(k_exp_forward(x3, 0.0, scale, sigma3))
    ref4 = k_exp_reference(x3, 0.0, scale, sigma3)
    assert out4.shape == (5, 7, 3)
    assert jnp.allclose(out4, ref4, atol=1e-5, rtol=1e-4), float(jnp.max(jnp.abs(out4 - ref4)))

    print("KERNEL_OK")
</pallas_src>

<mosaic_0001>
module attributes {stable_mosaic.version = 11 : i64} {
  func.func @_k_exp_kernel_bcast_y(%arg0: i32, %arg1: memref<1x256xf32, #tpu.memory_space<vmem>>, %arg2: memref<4x256xf32, #tpu.memory_space<vmem>>, %arg3: memref<256x128xf32, #tpu.memory_space<vmem>>, %arg4: memref<4x128xf32, #tpu.memory_space<vmem>>) attributes {dimension_semantics = [#tpu.dimension_semantics<parallel>], iteration_bounds = array<i64: 1>, scalar_prefetch = 0 : i64, scratch_operands = 0 : i64, tpu.core_type = #tpu.core_type<tc>, window_params = [{pipeline_mode = #tpu.pipeline_mode<synchronous>, transform_indices = @transform_0, window_bounds = array<i64: 1, 256>}, {transform_indices = @transform_1, window_bounds = array<i64: 4, 256>}, {pipeline_mode = #tpu.pipeline_mode<synchronous>, transform_indices = @transform_2, window_bounds = array<i64: 256, 128>}, {transform_indices = @transform_3, window_bounds = array<i64: 4, 128>}]} {
    %c0 = arith.constant 0 : index
    %c0_0 = arith.constant 0 : index
    %0 = vector.load %arg2[%c0, %c0_0] : memref<4x256xf32, #tpu.memory_space<vmem>>, vector<4x256xf32>
    %c0_1 = arith.constant 0 : index
    %c0_2 = arith.constant 0 : index
    %1 = vector.load %arg1[%c0_1, %c0_2] : memref<1x256xf32, #tpu.memory_space<vmem>>, vector<1x256xf32>
    %2 = vector.broadcast %1 : vector<1x256xf32> to vector<4x256xf32>
    %3 = arith.subf %0, %2 : vector<4x256xf32>
    %4 = arith.mulf %3, %3 : vector<4x256xf32>
    %c0_3 = arith.constant 0 : index
    %c0_4 = arith.constant 0 : index
    %5 = vector.load %arg3[%c0_3, %c0_4] : memref<256x128xf32, #tpu.memory_space<vmem>>, vector<256x128xf32>
    %cst = arith.constant dense<0.000000e+00> : vector<4x128xf32>
    %6 = tpu.matmul %4, %5, %cst {dimension_numbers = #tpu.dot_dimension_numbers<[1], [0], [0], [1], [0, 0, 1, 1], [], []>, precision = #tpu.contract_precision<fp32>} : vector<4x256xf32>, vector<256x128xf32>, vector<4x128xf32> -> vector<4x128xf32>
    %7 = math.sqrt %6 : vector<4x128xf32>
    %cst_5 = arith.constant 0.000000e+00 : f32
    %8 = vector.broadcast %cst_5 : f32 to vector<4x128xf32>
    %9 = arith.subf %8, %7 : vector<4x128xf32>
    %10 = math.exp %9 : vector<4x128xf32>
    %cst_6 = arith.constant 1.500000e+00 : f32
    %11 = vector.broadcast %cst_6 : f32 to vector<4x128xf32>
    %12 = arith.mulf %11, %10 : vector<4x128xf32>
    %c0_7 = arith.constant 0 : index
    %c0_8 = arith.constant 0 : index
    %13 = vector.load %arg4[%c0_7, %c0_8] : memref<4x128xf32, #tpu.memory_space<vmem>>, vector<4x128xf32>
    tpu.vector_store %arg4[%c0_7, %c0_8], %12 {strides = array<i32>} : memref<4x128xf32, #tpu.memory_space<vmem>>, vector<4x128xf32>,
    return
  }
  func.func @transform_0(%arg0: i32) -> (i32, i32) {
    %c0_i32 = arith.constant 0 : i32
    %c0_i32_0 = arith.constant 0 : i32
    %c0_i32_1 = arith.constant 0 : i32
    return %c0_i32, %c0_i32_0 : i32, i32
  }
  func.func @transform_1(%arg0: i32) -> (i32, i32) {
    %c0_i32 = arith.constant 0 : i32
    %c0_i32_0 = arith.constant 0 : i32
    return %arg0, %c0_i32 : i32, i32
  }
  func.func @transform_2(%arg0: i32) -> (i32, i32) {
    %c0_i32 = arith.constant 0 : i32
    %c0_i32_0 = arith.constant 0 : i32
    %c0_i32_1 = arith.constant 0 : i32
    return %c0_i32, %c0_i32_0 : i32, i32
  }
  func.func @transform_3(%arg0: i32) -> (i32, i32) {
    %c0_i32 = arith.constant 0 : i32
    %c0_i32_0 = arith.constant 0 : i32
    return %arg0, %c0_i32 : i32, i32
  }
}

</mosaic_0001>

<llo_original>
// kernel: tpu_custom_call.1
$region0: #{tpu_custom_call.1}
  #allocation0 [shape = 'u32[]', space=smem, size = 0x4, offset = 0x4, fixed_abs, tag = 'smem constant byte address 0x4 - core index']
  #allocation1 [shape = 'u32[144,128]{1,0:T(1,128)}', space=vmem, size = 0x12000, scoped, tag = 'internal scratch']
  %s0 = inlined_call_operand.hbm [shape: f32[1,256], index: 0, kind: input, shape index: {}]
  %s1 = inlined_call_operand.hbm [shape: f32[4,256], index: 1, kind: input, shape index: {}]
  %s2 = inlined_call_operand.hbm [shape: f32[256,128], index: 2, kind: input, shape index: {}]
  %s3 = inlined_call_operand.hbm [shape: f32[4,128], index: 3, kind: output, shape index: {}]
  %s4 = sld [smem:[#allocation0]]
  $region34: #{tpu_custom_call.1} parent=0
    _
  %s6 = ssub.s32 1, %s4
  %s7 = scalar_select 0, %s6, %s4
  $region1: #{tpu_custom_call.1} parent=0
    #allocation2 [shape = 'u8[1024]{0}', space=vmem, size = 0x400, scoped, tag = 'input window, operand 0, single buffered']
    #allocation3 [shape = 's32[1]{0}', space=sflag, size = 0x4, scoped, tag = 'scoped memory for tpu_custom_call.1']
    #allocation4 [shape = 's32[1]{0}', space=sflag, size = 0x4, scoped, tag = 'scoped memory for tpu_custom_call.1']
    #allocation5 [shape = 'u8[4096]{0}', space=vmem, size = 0x1000, scoped, tag = 'input window, operand 1, single buffered']
    #allocation6 [shape = 's32[1]{0}', space=sflag, size = 0x4, scoped, tag = 'scoped memory for tpu_custom_call.1']
    #allocation7 [shape = 'u8[131072]{0}', space=vmem, size = 0x20000, scoped, tag = 'input window, operand 2, single buffered']
    #allocation8 [shape = 'u8[2048]{0}', space=vmem, size = 0x800, scoped, tag = 'output window, operand 0, single buffered']
    %8 = vsyncpa [#allocation3], 0
    %9 = vsyncpa [#allocation6], 0
    %10 = vsyncpa [#allocation4], 0
    // Predicated region
    $region2: #{tpu_custom_call.1} parent=1 // pred_check
      _
    $region3: #{tpu_custom_call.1} parent=1 // pred_check_branch
      %12 = sbr.rel (0) target = $region5
    $region4: #{tpu_custom_call.1} parent=1 // pred_region
      %s14 = ssub.s32 32, 32
      %15 = vsyncadd [#allocation3], %s14
      %s17 = sshll.u32 [#allocation2], 4
      %s18 = int_to_ptr.vmem [resolvable:$true] %s17
      %20 = dma.hbm_to_vmem [thread:$0]  %s0, 32, %s18, [#allocation3]
    $region5: #{tpu_custom_call.1} parent=1 // pred_fallthru
      _
    // Predicated region
    $region6: #{tpu_custom_call.1} parent=1 // pred_check
      _
    $region7: #{tpu_custom_call.1} parent=1 // pred_check_branch
      %22 = sbr.rel (0) target = $region9
    $region8: #{tpu_custom_call.1} parent=1 // pred_region
      %s24 = ssub.s32 128, 128
      %25 = vsyncadd [#allocation6], %s24
      %s27 = sshll.u32 [#allocation5], 4
      %s28 = int_to_ptr.vmem [resolvable:$true] %s27
      %30 = dma.hbm_to_vmem [thread:$0]  %s1, 128, %s28, [#allocation6]
    $region9: #{tpu_custom_call.1} parent=1 // pred_fallthru
      _
    // Predicated region
    $region10: #{tpu_custom_call.1} parent=1 // pred_check
      _
    $region11: #{tpu_custom_call.1} parent=1 // pred_check_branch
      %32 = sbr.rel (0) target = $region13
    $region12: #{tpu_custom_call.1} parent=1 // pred_region
      %s34 = ssub.s32 4096, 4096
      %35 = vsyncadd [#allocation6], %s34
      %s36 = sshll.u32 [#allocation7], 4
      %s37 = int_to_ptr.vmem [resolvable:$true] %s36
      %42 = dma.hbm_to_vmem [thread:$0]  %s2, 4096, %s37, [#allocation6], 128, 128, 8
    $region13: #{tpu_custom_call.1} parent=1 // pred_fallthru
      _
    // Predicated region
    $region14: #{tpu_custom_call.1} parent=1 // pred_check
      _
    $region15: #{tpu_custom_call.1} parent=1 // pred_check_branch
      %44 = sbr.rel (0) target = $region17
    $region16: #{tpu_custom_call.1} parent=1 // pred_region
      %45 = dma.done [#allocation3], 32
    $region17: #{tpu_custom_call.1} parent=1 // pred_fallthru
      _
    // Predicated region
    $region18: #{tpu_custom_call.1} parent=1 // pred_check
      _
    $region19: #{tpu_custom_call.1} parent=1 // pred_check_branch
      %47 = sbr.rel (0) target = $region21
    $region20: #{tpu_custom_call.1} parent=1 // pred_region
      %48 = dma.done [#allocation6], 128
    $region21: #{tpu_custom_call.1} parent=1 // pred_fallthru
      _
    // Predicated region
    $region22: #{tpu_custom_call.1} parent=1 // pred_check
      _
    $region23: #{tpu_custom_call.1} parent=1 // pred_check_branch
      %50 = sbr.rel (0) target = $region25
    $region24: #{tpu_custom_call.1} parent=1 // pred_region
      %51 = dma.done [#allocation6], 4096
    $region25: #{tpu_custom_call.1} parent=1 // pred_fallthru
      _
    %v52 = vld [vmem:[#allocation5] sm:$0xff]
    %v53 = vld [vmem:[#allocation2] sm:$0x3]
    %v55 = vlaneseq
    %v56 = vshrl.u32 %v55, 7
    %v57 = vsub.s32 0, %v56
    %v58 = vrot.slane %v53, %v57
    %v59 = vlaneseq
    %v60 = vshrl.u32 %v59, 7
    %v61 = vsub.s32 1, %v60
    %v62 = vrot.slane %v53, %v61
    %v63 = vcombine.low %v58, %v62
    %v65 = vsub.f32 %v52, %v63
    %v66 = vmul.f32 %v65, %v65
    %v67 = vld [vmem:[#allocation7] sm:$0xff]
    %v68 = vld [vmem:[#allocation7 + $0x8] sm:$0xff]
    %v69 = vld [vmem:[#allocation7 + $0x10] sm:$0xff]
    %v70 = vld [vmem:[#allocation7 + $0x18] sm:$0xff]
    %v71 = vld [vmem:[#allocation7 + $0x20] sm:$0xff]
    %v72 = vld [vmem:[#allocation7 + $0x28] sm:$0xff]
    %v73 = vld [vmem:[#allocation7 + $0x30] sm:$0xff]
    %v74 = vld [vmem:[#allocation7 + $0x38] sm:$0xff]
    %v75 = vld [vmem:[#allocation7 + $0x40] sm:$0xff]
    %v76 = vld [vmem:[#allocation7 + $0x48] sm:$0xff]
    %v77 = vld [vmem:[#allocation7 + $0x50] sm:$0xff]
    %v78 = vld [vmem:[#allocation7 + $0x58] sm:$0xff]
    %v79 = vld [vmem:[#allocation7 + $0x60] sm:$0xff]
    %v80 = vld [vmem:[#allocation7 + $0x68] sm:$0xff]
    %v81 = vld [vmem:[#allocation7 + $0x70] sm:$0xff]
    %v82 = vld [vmem:[#allocation7 + $0x78] sm:$0xff]
    %v83 = vld [vmem:[#allocation7 + $0x80] sm:$0xff]
    %v84 = vld [vmem:[#allocation7 + $0x88] sm:$0xff]
    %v85 = vld [vmem:[#allocation7 + $0x90] sm:$0xff]
    %v86 = vld [vmem:[#allocation7 + $0x98] sm:$0xff]
    %v87 = vld [vmem:[#allocation7 + $0xa0] sm:$0xff]
    %v88 = vld [vmem:[#allocation7 + $0xa8] sm:$0xff]
    %v89 = vld [vmem:[#allocation7 + $0xb0] sm:$0xff]
    %v90 = vld [vmem:[#allocation7 + $0xb8] sm:$0xff]
    %v91 = vld [vmem:[#allocation7 + $0xc0] sm:$0xff]
    %v92 = vld [vmem:[#allocation7 + $0xc8] sm:$0xff]
    %v93 = vld [vmem:[#allocation7 + $0xd0] sm:$0xff]
    %v94 = vld [vmem:[#allocation7 + $0xd8] sm:$0xff]
    %v95 = vld [vmem:[#allocation7 + $0xe0] sm:$0xff]
    %v96 = vld [vmem:[#allocation7 + $0xe8] sm:$0xff]
    %v97 = vld [vmem:[#allocation7 + $0xf0] sm:$0xff]
    %v98 = vld [vmem:[#allocation7 + $0xf8] sm:$0xff]
    %v100 = vcombine.high %v66, %v66
    %102 = vmatprep.subr.mxu0 0.0
    %v103 = vand.u32 %v67, 4294901760
    %104 = vmatpush1.msra.mxu0 %v103
    %105 = vmatprep.subr.mxu0 0.0
    %v106 = vand.u32 %v68, 4294901760
    %107 = vmatpush1.msra.mxu0 %v106
    %108 = vmatprep.subr.mxu0 0.0
    %v109 = vand.u32 %v69, 4294901760
    %110 = vmatpush1.msra.mxu0 %v109
    %111 = vmatprep.subr.mxu0 0.0
    %v112 = vand.u32 %v70, 4294901760
    %113 = vmatpush1.msra.mxu0 %v112
    %114 = vmatprep.subr.mxu0 0.0
    %v115 = vand.u32 %v71, 4294901760
    %116 = vmatpush1.msra.mxu0 %v115
    %117 = vmatprep.subr.mxu0 0.0
    %v118 = vand.u32 %v72, 4294901760
    %119 = vmatpush1.msra.mxu0 %v118
    %120 = vmatprep.subr.mxu0 0.0
    %v121 = vand.u32 %v73, 4294901760
    %122 = vmatpush1.msra.mxu0 %v121
    %123 = vmatprep.subr.mxu0 0.0
    %v124 = vand.u32 %v74, 4294901760
    %125 = vmatpush1.msra.mxu0 %v124
    %126 = vmatprep.subr.mxu0 0.0
    %v127 = vand.u32 %v75, 4294901760
    %128 = vmatpush1.msra.mxu0 %v127
    %129 = vmatprep.subr.mxu0 0.0
    %v130 = vand.u32 %v76, 4294901760
    %131 = vmatpush1.msra.mxu0 %v130
    %132 = vmatprep.subr.mxu0 0.0
    %v133 = vand.u32 %v77, 4294901760
    %134 = vmatpush1.msra.mxu0 %v133
    %135 = vmatprep.subr.mxu0 0.0
    %v136 = vand.u32 %v78, 4294901760
    %137 = vmatpush1.msra.mxu0 %v136
    %138 = vmatprep.subr.mxu0 0.0
    %v139 = vand.u32 %v79, 4294901760
    %140 = vmatpush1.msra.mxu0 %v139
    %141 = vmatprep.subr.mxu0 0.0
    %v142 = vand.u32 %v80, 4294901760
    %143 = vmatpush1.msra.mxu0 %v142
    %144 = vmatprep.subr.mxu0 0.0
    %v145 = vand.u32 %v81, 4294901760
    %146 = vmatpush1.msra.mxu0 %v145
    %147 = vmatprep.subr.mxu0 0.0
    %v148 = vand.u32 %v82, 4294901760
    %149 = vmatpush1.msra.mxu0 %v148
    %150 = vmatprep.subr.mxu0 0.0
    %v151 = vand.u32 %v83, 4294901760
    %152 = vmatpush1.msra.mxu0 %v151
    %153 = vmatprep.subr.mxu0 0.0
    %v154 = vand.u32 %v84, 4294901760
    %155 = vmatpush1.msra.mxu0 %v154
    %156 = vmatprep.subr.mxu0 0.0
    %v157 = vand.u32 %v85, 4294901760
    %158 = vmatpush1.msra.mxu0 %v157
    %159 = vmatprep.subr.mxu0 0.0
    %v160 = vand.u32 %v86, 4294901760
    %161 = vmatpush1.msra.mxu0 %v160
    %162 = vmatprep.subr.mxu0 0.0
    %v163 = vand.u32 %v87, 4294901760
    %164 = vmatpush1.msra.mxu0 %v163
    %165 = vmatprep.subr.mxu0 0.0
    %v166 = vand.u32 %v88, 4294901760
    %167 = vmatpush1.msra.mxu0 %v166
    %168 = vmatprep.subr.mxu0 0.0
    %v169 = vand.u32 %v89, 4294901760
    %170 = vmatpush1.msra.mxu0 %v169
    %171 = vmatprep.subr.mxu0 0.0
    %v172 = vand.u32 %v90, 4294901760
    %173 = vmatpush1.msra.mxu0 %v172
    %174 = vmatprep.subr.mxu0 0.0
    %v175 = vand.u32 %v91, 4294901760
    %176 = vmatpush1.msra.mxu0 %v175
    %177 = vmatprep.subr.mxu0 0.0
    %v178 = vand.u32 %v92, 4294901760
    %179 = vmatpush1.msra.mxu0 %v178
    %180 = vmatprep.subr.mxu0 0.0
    %v181 = vand.u32 %v93, 4294901760
    %182 = vmatpush1.msra.mxu0 %v181
    %183 = vmatprep.subr.mxu0 0.0
    %v184 = vand.u32 %v94, 4294901760
    %185 = vmatpush1.msra.mxu0 %v184
    %186 = vmatprep.subr.mxu0 0.0
    %v187 = vand.u32 %v95, 4294901760
    %188 = vmatpush1.msra.mxu0 %v187
    %189 = vmatprep.subr.mxu0 0.0
    %v190 = vand.u32 %v96, 4294901760
    %191 = vmatpush1.msra.mxu0 %v190
    %192 = vmatprep.subr.mxu0 0.0
    %v193 = vand.u32 %v97, 4294901760
    %194 = vmatpush1.msra.mxu0 %v193
    %195 = vmatprep.subr.mxu0 0.0
    %v196 = vand.u32 %v98, 4294901760
    %197 = vmatpush1.msra.mxu0 %v196
    %v198 = vand.u32 %v100, 4294901760
    %v199 = vsub.f32 %v100, %v198
    %v200 = vand.u32 %v199, 4294901760
    %v201 = vsub.f32 %v199, %v200
    %v202 = vand.u32 %v201, 4294901760
    %203 = vmatprep.mubr.f32.mxu0 %v202
    %v204 = vand.u32 %v66, 4294901760
    %v205 = vsub.f32 %v66, %v204
    %v206 = vand.u32 %v205, 4294901760
    %v207 = vsub.f32 %v205, %v206
    %v208 = vand.u32 %v207, 4294901760
    %209 = vmatmul.mubr.f32.gmra.mrb[0].mxu0 %v208
    %v210 = vpop.f32.mrb[0].mxu0
    %v211 = vadd.f32 0.0, %v210
    %v212 = vpop.f32.mrb[0].mxu0
    %213 = vdwg.mxu0
    %214 = vmatprep.subr.mxu0 0.0
    %v215 = vand.u32 %v67, 4294901760
    %v216 = vsub.f32 %v67, %v215
    %v217 = vand.u32 %v216, 4294901760
    %v218 = vsub.f32 %v216, %v217
    %v219 = vand.u32 %v218, 4294901760
    %220 = vmatpush1.msra.mxu0 %v219
    %221 = vmatprep.subr.mxu0 0.0
    %v222 = vand.u32 %v68, 4294901760
    %v223 = vsub.f32 %v68, %v222
    %v224 = vand.u32 %v223, 4294901760
    %v225 = vsub.f32 %v223, %v224
    %v226 = vand.u32 %v225, 4294901760
    %227 = vmatpush1.msra.mxu0 %v226
    %228 = vmatprep.subr.mxu0 0.0
    %v229 = vand.u32 %v69, 4294901760
    %v230 = vsub.f32 %v69, %v229
    %v231 = vand.u32 %v230, 4294901760
    %v232 = vsub.f32 %v230, %v231
    %v233 = vand.u32 %v232, 4294901760
    %234 = vmatpush1.msra.mxu0 %v233
    %235 = vmatprep.subr.mxu0 0.0
    %v236 = vand.u32 %v70, 4294901760
    %v237 = vsub.f32 %v70, %v236
    %v238 = vand.u32 %v237, 4294901760
    %v239 = vsub.f32 %v237, %v238
    %v240 = vand.u32 %v239, 4294901760
    %241 = vmatpush1.msra.mxu0 %v240
    %242 = vmatprep.subr.mxu0 0.0
    %v243 = vand.u32 %v71, 4294901760
    %v244 = vsub.f32 %v71, %v243
    %v245 = vand.u32 %v244, 4294901760
    %v246 = vsub.f32 %v244, %v245
    %v247 = vand.u32 %v246, 4294901760
    %248 = vmatpush1.msra.mxu0 %v247
    %249 = vmatprep.subr.mxu0 0.0
    %v250 = vand.u32 %v72, 4294901760
    %v251 = vsub.f32 %v72, %v250
    %v252 = vand.u32 %v251, 4294901760
    %v253 = vsub.f32 %v251, %v252
    %v254 = vand.u32 %v253, 4294901760
    %255 = vmatpush1.msra.mxu0 %v254
    %256 = vmatprep.subr.mxu0 0.0
    %v257 = vand.u32 %v73, 4294901760
    %v258 = vsub.f32 %v73, %v257
    %v259 = vand.u32 %v258, 4294901760
    %v260 = vsub.f32 %v258, %v259
    %v261 = vand.u32 %v260, 4294901760
    %262 = vmatpush1.msra.mxu0 %v261
    %263 = vmatprep.subr.mxu0 0.0
    %v264 = vand.u32 %v74, 4294901760
    %v265 = vsub.f32 %v74, %v264
    %v266 = vand.u32 %v265, 4294901760
    %v267 = vsub.f32 %v265, %v266
    %v268 = vand.u32 %v267, 4294901760
    %269 = vmatpush1.msra.mxu0 %v268
    %270 = vmatprep.subr.mxu0 0.0
    %v271 = vand.u32 %v75, 4294901760
    %v272 = vsub.f32 %v75, %v271
    %v273 = vand.u32 %v272, 4294901760
    %v274 = vsub.f32 %v272, %v273
    %v275 = vand.u32 %v274, 4294901760
    %276 = vmatpush1.msra.mxu0 %v275
    %277 = vmatprep.subr.mxu0 0.0
    %v278 = vand.u32 %v76, 4294901760
    %v279 = vsub.f32 %v76, %v278
    %v280 = vand.u32 %v279, 4294901760
    %v281 = vsub.f32 %v279, %v280
    %v282 = vand.u32 %v281, 4294901760
    %283 = vmatpush1.msra.mxu0 %v282
    %284 = vmatprep.subr.mxu0 0.0
    %v285 = vand.u32 %v77, 4294901760
    %v286 = vsub.f32 %v77, %v285
    %v287 = vand.u32 %v286, 4294901760
    %v288 = vsub.f32 %v286, %v287
    %v289 = vand.u32 %v288, 4294901760
    %290 = vmatpush1.msra.mxu0 %v289
    %291 = vmatprep.subr.mxu0 0.0
    %v292 = vand.u32 %v78, 4294901760
    %v293 = vsub.f32 %v78, %v292
    %v294 = vand.u32 %v293, 4294901760
    %v295 = vsub.f32 %v293, %v294
    %v296 = vand.u32 %v295, 4294901760
    %297 = vmatpush1.msra.mxu0 %v296
    %298 = vmatprep.subr.mxu0 0.0
    %v299 = vand.u32 %v79, 4294901760
    %v300 = vsub.f32 %v79, %v299
    %v301 = vand.u32 %v300, 4294901760
    %v302 = vsub.f32 %v300, %v301
    %v303 = vand.u32 %v302, 4294901760
    %304 = vmatpush1.msra.mxu0 %v303
    %305 = vmatprep.subr.mxu0 0.0
    %v306 = vand.u32 %v80, 4294901760
    %v307 = vsub.f32 %v80, %v306
    %v308 = vand.u32 %v307, 4294901760
    %v309 = vsub.f32 %v307, %v308
    %v310 = vand.u32 %v309, 4294901760
    %311 = vmatpush1.msra.mxu0 %v310
    %312 = vmatprep.subr.mxu0 0.0
    %v313 = vand.u32 %v81, 4294901760
    %v314 = vsub.f32 %v81, %v313
    %v315 = vand.u32 %v314, 4294901760
    %v316 = vsub.f32 %v314, %v315
    %v317 = vand.u32 %v316, 4294901760
    %318 = vmatpush1.msra.mxu0 %v317
    %319 = vmatprep.subr.mxu0 0.0
    %v320 = vand.u32 %v82, 4294901760
    %v321 = vsub.f32 %v82, %v320
    %v322 = vand.u32 %v321, 4294901760
    %v323 = vsub.f32 %v321, %v322
    %v324 = vand.u32 %v323, 4294901760
    %325 = vmatpush1.msra.mxu0 %v324
    %326 = vmatprep.subr.mxu0 0.0
    %v327 = vand.u32 %v83, 4294901760
    %v328 = vsub.f32 %v83, %v327
    %v329 = vand.u32 %v328, 4294901760
    %v330 = vsub.f32 %v328, %v329
    %v331 = vand.u32 %v330, 4294901760
    %332 = vmatpush1.msra.mxu0 %v331
    %333 = vmatprep.subr.mxu0 0.0
    %v334 = vand.u32 %v84, 4294901760
    %v335 = vsub.f32 %v84, %v334
    %v336 = vand.u32 %v335, 4294901760
    %v337 = vsub.f32 %v335, %v336
    %v338 = vand.u32 %v337, 4294901760
    %339 = vmatpush1.msra.mxu0 %v338
    %340 = vmatprep.subr.mxu0 0.0
    %v341 = vand.u32 %v85, 4294901760
    %v342 = vsub.f32 %v85, %v341
    %v343 = vand.u32 %v342, 4294901760
    %v344 = vsub.f32 %v342, %v343
    %v345 = vand.u32 %v344, 4294901760
    %346 = vmatpush1.msra.mxu0 %v345
    %347 = vmatprep.subr.mxu0 0.0
    %v348 = vand.u32 %v86, 4294901760
    %v349 = vsub.f32 %v86, %v348
    %v350 = vand.u32 %v349, 4294901760
    %v351 = vsub.f32 %v349, %v350
    %v352 = vand.u32 %v351, 4294901760
    %353 = vmatpush1.msra.mxu0 %v352
    %354 = vmatprep.subr.mxu0 0.0
    %v355 = vand.u32 %v87, 4294901760
    %v356 = vsub.f32 %v87, %v355
    %v357 = vand.u32 %v356, 4294901760
    %v358 = vsub.f32 %v356, %v357
    %v359 = vand.u32 %v358, 4294901760
    %360 = vmatpush1.msra.mxu0 %v359
    %361 = vmatprep.subr.mxu0 0.0
    %v362 = vand.u32 %v88, 4294901760
    %v363 = vsub.f32 %v88, %v362
    %v364 = vand.u32 %v363, 4294901760
    %v365 = vsub.f32 %v363, %v364
    %v366 = vand.u32 %v365, 4294901760
    %367 = vmatpush1.msra.mxu0 %v366
    %368 = vmatprep.subr.mxu0 0.0
    %v369 = vand.u32 %v89, 4294901760
    %v370 = vsub.f32 %v89, %v369
    %v371 = vand.u32 %v370, 4294901760
    %v372 = vsub.f32 %v370, %v371
    %v373 = vand.u32 %v372, 4294901760
    %374 = vmatpush1.msra.mxu0 %v373
    %375 = vmatprep.subr.mxu0 0.0
    %v376 = vand.u32 %v90, 4294901760
    %v377 = vsub.f32 %v90, %v376
    %v378 = vand.u32 %v377, 4294901760
    %v379 = vsub.f32 %v377, %v378
    %v380 = vand.u32 %v379, 4294901760
    %381 = vmatpush1.msra.mxu0 %v380
    %382 = vmatprep.subr.mxu0 0.0
    %v383 = vand.u32 %v91, 4294901760
    %v384 = vsub.f32 %v91, %v383
    %v385 = vand.u32 %v384, 4294901760
    %v386 = vsub.f32 %v384, %v385
    %v387 = vand.u32 %v386, 4294901760
    %388 = vmatpush1.msra.mxu0 %v387
    %389 = vmatprep.subr.mxu0 0.0
    %v390 = vand.u32 %v92, 4294901760
    %v391 = vsub.f32 %v92, %v390
    %v392 = vand.u32 %v391, 4294901760
    %v393 = vsub.f32 %v391, %v392
    %v394 = vand.u32 %v393, 4294901760
    %395 = vmatpush1.msra.mxu0 %v394
    %396 = vmatprep.subr.mxu0 0.0
    %v397 = vand.u32 %v93, 4294901760
    %v398 = vsub.f32 %v93, %v397
    %v399 = vand.u32 %v398, 4294901760
    %v400 = vsub.f32 %v398, %v399
    %v401 = vand.u32 %v400, 4294901760
    %402 = vmatpush1.msra.mxu0 %v401
    %403 = vmatprep.subr.mxu0 0.0
    %v404 = vand.u32 %v94, 4294901760
    %v405 = vsub.f32 %v94, %v404
    %v406 = vand.u32 %v405, 4294901760
    %v407 = vsub.f32 %v405, %v406
    %v408 = vand.u32 %v407, 4294901760
    %409 = vmatpush1.msra.mxu0 %v408
    %410 = vmatprep.subr.mxu0 0.0
    %v411 = vand.u32 %v95, 4294901760
    %v412 = vsub.f32 %v95, %v411
    %v413 = vand.u32 %v412, 4294901760
    %v414 = vsub.f32 %v412, %v413
    %v415 = vand.u32 %v414, 4294901760
    %416 = vmatpush1.msra.mxu0 %v415
    %417 = vmatprep.subr.mxu0 0.0
    %v418 = vand.u32 %v96, 4294901760
    %v419 = vsub.f32 %v96, %v418
    %v420 = vand.u32 %v419, 4294901760
    %v421 = vsub.f32 %v419, %v420
    %v422 = vand.u32 %v421, 4294901760
    %423 = vmatpush1.msra.mxu0 %v422
    %424 = vmatprep.subr.mxu0 0.0
    %v425 = vand.u32 %v97, 4294901760
    %v426 = vsub.f32 %v97, %v425
    %v427 = vand.u32 %v426, 4294901760
    %v428 = vsub.f32 %v426, %v427
    %v429 = vand.u32 %v428, 4294901760
    %430 = vmatpush1.msra.mxu0 %v429
    %431 = vmatprep.subr.mxu0 0.0
    %v432 = vand.u32 %v98, 4294901760
    %v433 = vsub.f32 %v98, %v432
    %v434 = vand.u32 %v433, 4294901760
    %v435 = vsub.f32 %v433, %v434
    %v436 = vand.u32 %v435, 4294901760
    %437 = vmatpush1.msra.mxu0 %v436
    %v438 = vand.u32 %v100, 4294901760
    %439 = vmatprep.mubr.f32.mxu0 %v438
    %v440 = vand.u32 %v66, 4294901760
    %441 = vmatmul.mubr.f32.gmra.mrb[0].mxu0 %v440
    %v442 = vpop.f32.mrb[0].mxu0
    %v443 = vadd.f32 %v211, %v442
    %v444 = vpop.f32.mrb[0].mxu0
    %445 = vdwg.mxu0
    %446 = vmatprep.subr.mxu0 0.0
    %v447 = vand.u32 %v67, 4294901760
    %v448 = vsub.f32 %v67, %v447
    %449 = vmatpush1.msra.mxu0 %v448
    %450 = vmatprep.subr.mxu0 0.0
    %v451 = vand.u32 %v68, 4294901760
    %v452 = vsub.f32 %v68, %v451
    %453 = vmatpush1.msra.mxu0 %v452
    %454 = vmatprep.subr.mxu0 0.0
    %v455 = vand.u32 %v69, 4294901760
    %v456 = vsub.f32 %v69, %v455
    %457 = vmatpush1.msra.mxu0 %v456
    %458 = vmatprep.subr.mxu0 0.0
    %v459 = vand.u32 %v70, 4294901760
    %v460 = vsub.f32 %v70, %v459
    %461 = vmatpush1.msra.mxu0 %v460
    %462 = vmatprep.subr.mxu0 0.0
    %v463 = vand.u32 %v71, 4294901760
    %v464 = vsub.f32 %v71, %v463
    %465 = vmatpush1.msra.mxu0 %v464
    %466 = vmatprep.subr.mxu0 0.0
    %v467 = vand.u32 %v72, 4294901760
    %v468 = vsub.f32 %v72, %v467
    %469 = vmatpush1.msra.mxu0 %v468
    %470 = vmatprep.subr.mxu0 0.0
    %v471 = vand.u32 %v73, 4294901760
    %v472 = vsub.f32 %v73, %v471
    %473 = vmatpush1.msra.mxu0 %v472
    %474 = vmatprep.subr.mxu0 0.0
    %v475 = vand.u32 %v74, 4294901760
    %v476 = vsub.f32 %v74, %v475
    %477 = vmatpush1.msra.mxu0 %v476
    %478 = vmatprep.subr.mxu0 0.0
    %v479 = vand.u32 %v75, 4294901760
    %v480 = vsub.f32 %v75, %v479
    %481 = vmatpush1.msra.mxu0 %v480
    %482 = vmatprep.subr.mxu0 0.0
    %v483 = vand.u32 %v76, 4294901760
    %v484 = vsub.f32 %v76, %v483
    %485 = vmatpush1.msra.mxu0 %v484
    %486 = vmatprep.subr.mxu0 0.0
    %v487 = vand.u32 %v77, 4294901760
    %v488 = vsub.f32 %v77, %v487
    %489 = vmatpush1.msra.mxu0 %v488
    %490 = vmatprep.subr.mxu0 0.0
    %v491 = vand.u32 %v78, 4294901760
    %v492 = vsub.f32 %v78, %v491
    %493 = vmatpush1.msra.mxu0 %v492
    %494 = vmatprep.subr.mxu0 0.0
    %v495 = vand.u32 %v79, 4294901760
    %v496 = vsub.f32 %v79, %v495
    %497 = vmatpush1.msra.mxu0 %v496
    %498 = vmatprep.subr.mxu0 0.0
    %v499 = vand.u32 %v80, 4294901760
    %v500 = vsub.f32 %v80, %v499
    %501 = vmatpush1.msra.mxu0 %v500
    %502 = vmatprep.subr.mxu0 0.0
    %v503 = vand.u32 %v81, 4294901760
    %v504 = vsub.f32 %v81, %v503
    %505 = vmatpush1.msra.mxu0 %v504
    %506 = vmatprep.subr.mxu0 0.0
    %v507 = vand.u32 %v82, 4294901760
    %v508 = vsub.f32 %v82, %v507
    %509 = vmatpush1.msra.mxu0 %v508
    %510 = vmatprep.subr.mxu0 0.0
    %v511 = vand.u32 %v83, 4294901760
    %v512 = vsub.f32 %v83, %v511
    %513 = vmatpush1.msra.mxu0 %v512
    %514 = vmatprep.subr.mxu0 0.0
    %v515 = vand.u32 %v84, 4294901760
    %v516 = vsub.f32 %v84, %v515
    %517 = vmatpush1.msra.mxu0 %v516
    %518 = vmatprep.subr.mxu0 0.0
    %v519 = vand.u32 %v85, 4294901760
    %v520 = vsub.f32 %v85, %v519
    %521 = vmatpush1.msra.mxu0 %v520
    %522 = vmatprep.subr.mxu0 0.0
    %v523 = vand.u32 %v86, 4294901760
    %v524 = vsub.f32 %v86, %v523
    %525 = vmatpush1.msra.mxu0 %v524
    %526 = vmatprep.subr.mxu0 0.0
    %v527 = vand.u32 %v87, 4294901760
    %v528 = vsub.f32 %v87, %v527
    %529 = vmatpush1.msra.mxu0 %v528
    %530 = vmatprep.subr.mxu0 0.0
    %v531 = vand.u32 %v88, 4294901760
    %v532 = vsub.f32 %v88, %v531
    %533 = vmatpush1.msra.mxu0 %v532
    %534 = vmatprep.subr.mxu0 0.0
    %v535 = vand.u32 %v89, 4294901760
    %v536 = vsub.f32 %v89, %v535
    %537 = vmatpush1.msra.mxu0 %v536
    %538 = vmatprep.subr.mxu0 0.0
    %v539 = vand.u32 %v90, 4294901760
    %v540 = vsub.f32 %v90, %v539
    %541 = vmatpush1.msra.mxu0 %v540
    %542 = vmatprep.subr.mxu0 0.0
    %v543 = vand.u32 %v91, 4294901760
    %v544 = vsub.f32 %v91, %v543
    %545 = vmatpush1.msra.mxu0 %v544
    %546 = vmatprep.subr.mxu0 0.0
    %v547 = vand.u32 %v92, 4294901760
    %v548 = vsub.f32 %v92, %v547
    %549 = vmatpush1.msra.mxu0 %v548
    %550 = vmatprep.subr.mxu0 0.0
    %v551 = vand.u32 %v93, 4294901760
    %v552 = vsub.f32 %v93, %v551
    %553 = vmatpush1.msra.mxu0 %v552
    %554 = vmatprep.subr.mxu0 0.0
    %v555 = vand.u32 %v94, 4294901760
    %v556 = vsub.f32 %v94, %v555
    %557 = vmatpush1.msra.mxu0 %v556
    %558 = vmatprep.subr.mxu0 0.0
    %v559 = vand.u32 %v95, 4294901760
    %v560 = vsub.f32 %v95, %v559
    %561 = vmatpush1.msra.mxu0 %v560
    %562 = vmatprep.subr.mxu0 0.0
    %v563 = vand.u32 %v96, 4294901760
    %v564 = vsub.f32 %v96, %v563
    %565 = vmatpush1.msra.mxu0 %v564
    %566 = vmatprep.subr.mxu0 0.0
    %v567 = vand.u32 %v97, 4294901760
    %v568 = vsub.f32 %v97, %v567
    %569 = vmatpush1.msra.mxu0 %v568
    %570 = vmatprep.subr.mxu0 0.0
    %v571 = vand.u32 %v98, 4294901760
    %v572 = vsub.f32 %v98, %v571
    %573 = vmatpush1.msra.mxu0 %v572
    %v574 = vand.u32 %v100, 4294901760
    %v575 = vsub.f32 %v100, %v574
    %576 = vmatprep.mubr.f32.mxu0 %v575
    %v577 = vand.u32 %v66, 4294901760
    %v578 = vsub.f32 %v66, %v577
    %579 = vmatmul.mubr.f32.gmra.mrb[0].mxu0 %v578
    %v580 = vpop.f32.mrb[0].mxu0
    %v581 = vadd.f32 %v443, %v580
    %v582 = vpop.f32.mrb[0].mxu0
    %583 = vdwg.mxu0
    %584 = vmatprep.subr.mxu0 0.0
    %v585 = vand.u32 %v67, 4294901760
    %586 = vmatpush1.msra.mxu0 %v585
    %587 = vmatprep.subr.mxu0 0.0
    %v588 = vand.u32 %v68, 4294901760
    %589 = vmatpush1.msra.mxu0 %v588
    %590 = vmatprep.subr.mxu0 0.0
    %v591 = vand.u32 %v69, 4294901760
    %592 = vmatpush1.msra.mxu0 %v591
    %593 = vmatprep.subr.mxu0 0.0
    %v594 = vand.u32 %v70, 4294901760
    %595 = vmatpush1.msra.mxu0 %v594
    %596 = vmatprep.subr.mxu0 0.0
    %v597 = vand.u32 %v71, 4294901760
    %598 = vmatpush1.msra.mxu0 %v597
    %599 = vmatprep.subr.mxu0 0.0
    %v600 = vand.u32 %v72, 4294901760
    %601 = vmatpush1.msra.mxu0 %v600
    %602 = vmatprep.subr.mxu0 0.0
    %v603 = vand.u32 %v73, 4294901760
    %604 = vmatpush1.msra.mxu0 %v603
    %605 = vmatprep.subr.mxu0 0.0
    %v606 = vand.u32 %v74, 4294901760
    %607 = vmatpush1.msra.mxu0 %v606
    %608 = vmatprep.subr.mxu0 0.0
    %v609 = vand.u32 %v75, 4294901760
    %610 = vmatpush1.msra.mxu0 %v609
    %611 = vmatprep.subr.mxu0 0.0
    %v612 = vand.u32 %v76, 4294901760
    %613 = vmatpush1.msra.mxu0 %v612
    %614 = vmatprep.subr.mxu0 0.0
    %v615 = vand.u32 %v77, 4294901760
    %616 = vmatpush1.msra.mxu0 %v615
    %617 = vmatprep.subr.mxu0 0.0
    %v618 = vand.u32 %v78, 4294901760
    %619 = vmatpush1.msra.mxu0 %v618
    %620 = vmatprep.subr.mxu0 0.0
    %v621 = vand.u32 %v79, 4294901760
    %622 = vmatpush1.msra.mxu0 %v621
    %623 = vmatprep.subr.mxu0 0.0
    %v624 = vand.u32 %v80, 4294901760
    %625 = vmatpush1.msra.mxu0 %v624
    %626 = vmatprep.subr.mxu0 0.0
    %v627 = vand.u32 %v81, 4294901760
    %628 = vmatpush1.msra.mxu0 %v627
    %629 = vmatprep.subr.mxu0 0.0
    %v630 = vand.u32 %v82, 4294901760
    %631 = vmatpush1.msra.mxu0 %v630
    %632 = vmatprep.subr.mxu0 0.0
    %v633 = vand.u32 %v83, 4294901760
    %634 = vmatpush1.msra.mxu0 %v633
    %635 = vmatprep.subr.mxu0 0.0
    %v636 = vand.u32 %v84, 4294901760
    %637 = vmatpush1.msra.mxu0 %v636
    %638 = vmatprep.subr.mxu0 0.0
    %v639 = vand.u32 %v85, 4294901760
    %640 = vmatpush1.msra.mxu0 %v639
    %641 = vmatprep.subr.mxu0 0.0
    %v642 = vand.u32 %v86, 4294901760
    %643 = vmatpush1.msra.mxu0 %v642
    %644 = vmatprep.subr.mxu0 0.0
    %v645 = vand.u32 %v87, 4294901760
    %646 = vmatpush1.msra.mxu0 %v645
    %647 = vmatprep.subr.mxu0 0.0
    %v648 = vand.u32 %v88, 4294901760
    %649 = vmatpush1.msra.mxu0 %v648
    %650 = vmatprep.subr.mxu0 0.0
    %v651 = vand.u32 %v89, 4294901760
    %652 = vmatpush1.msra.mxu0 %v651
    %653 = vmatprep.subr.mxu0 0.0
    %v654 = vand.u32 %v90, 4294901760
    %655 = vmatpush1.msra.mxu0 %v654
    %656 = vmatprep.subr.mxu0 0.0
    %v657 = vand.u32 %v91, 4294901760
    %658 = vmatpush1.msra.mxu0 %v657
    %659 = vmatprep.subr.mxu0 0.0
    %v660 = vand.u32 %v92, 4294901760
    %661 = vmatpush1.msra.mxu0 %v660
    %662 = vmatprep.subr.mxu0 0.0
    %v663 = vand.u32 %v93, 4294901760
    %664 = vmatpush1.msra.mxu0 %v663
    %665 = vmatprep.subr.mxu0 0.0
    %v666 = vand.u32 %v94, 4294901760
    %667 = vmatpush1.msra.mxu0 %v666
    %668 = vmatprep.subr.mxu0 0.0
    %v669 = vand.u32 %v95, 4294901760
    %670 = vmatpush1.msra.mxu0 %v669
    %671 = vmatprep.subr.mxu0 0.0
    %v672 = vand.u32 %v96, 4294901760
    %673 = vmatpush1.msra.mxu0 %v672
    %674 = vmatprep.subr.mxu0 0.0
    %v675 = vand.u32 %v97, 4294901760
    %676 = vmatpush1.msra.mxu0 %v675
    %677 = vmatprep.subr.mxu0 0.0
    %v678 = vand.u32 %v98, 4294901760
    %679 = vmatpush1.msra.mxu0 %v678
    %v680 = vand.u32 %v100, 4294901760
    %v681 = vsub.f32 %v100, %v680
    %v682 = vand.u32 %v681, 4294901760
    %683 = vmatprep.mubr.f32.mxu0 %v682
    %v684 = vand.u32 %v66, 4294901760
    %v685 = vsub.f32 %v66, %v684
    %v686 = vand.u32 %v685, 4294901760
    %687 = vmatmul.mubr.f32.gmra.mrb[0].mxu0 %v686
    %v688 = vpop.f32.mrb[0].mxu0
    %v689 = vadd.f32 %v581, %v688
    %v690 = vpop.f32.mrb[0].mxu0
    %691 = vdwg.mxu0
    %692 = vmatprep.subr.mxu0 0.0
    %v693 = vand.u32 %v67, 4294901760
    %v694 = vsub.f32 %v67, %v693
    %v695 = vand.u32 %v694, 4294901760
    %696 = vmatpush1.msra.mxu0 %v695
    %697 = vmatprep.subr.mxu0 0.0
    %v698 = vand.u32 %v68, 4294901760
    %v699 = vsub.f32 %v68, %v698
    %v700 = vand.u32 %v699, 4294901760
    %701 = vmatpush1.msra.mxu0 %v700
    %702 = vmatprep.subr.mxu0 0.0
    %v703 = vand.u32 %v69, 4294901760
    %v704 = vsub.f32 %v69, %v703
    %v705 = vand.u32 %v704, 4294901760
    %706 = vmatpush1.msra.mxu0 %v705
    %707 = vmatprep.subr.mxu0 0.0
    %v708 = vand.u32 %v70, 4294901760
    %v709 = vsub.f32 %v70, %v708
    %v710 = vand.u32 %v709, 4294901760
    %711 = vmatpush1.msra.mxu0 %v710
    %712 = vmatprep.subr.mxu0 0.0
    %v713 = vand.u32 %v71, 4294901760
    %v714 = vsub.f32 %v71, %v713
    %v715 = vand.u32 %v714, 4294901760
    %716 = vmatpush1.msra.mxu0 %v715
    %717 = vmatprep.subr.mxu0 0.0
    %v718 = vand.u32 %v72, 4294901760
    %v719 = vsub.f32 %v72, %v718
    %v720 = vand.u32 %v719, 4294901760
    %721 = vmatpush1.msra.mxu0 %v720
    %722 = vmatprep.subr.mxu0 0.0
    %v723 = vand.u32 %v73, 4294901760
    %v724 = vsub.f32 %v73, %v723
    %v725 = vand.u32 %v724, 4294901760
    %726 = vmatpush1.msra.mxu0 %v725
    %727 = vmatprep.subr.mxu0 0.0
    %v728 = vand.u32 %v74, 4294901760
    %v729 = vsub.f32 %v74, %v728
    %v730 = vand.u32 %v729, 4294901760
    %731 = vmatpush1.msra.mxu0 %v730
    %732 = vmatprep.subr.mxu0 0.0
    %v733 = vand.u32 %v75, 4294901760
    %v734 = vsub.f32 %v75, %v733
    %v735 = vand.u32 %v734, 4294901760
    %736 = vmatpush1.msra.mxu0 %v735
    %737 = vmatprep.subr.mxu0 0.0
    %v738 = vand.u32 %v76, 4294901760
    %v739 = vsub.f32 %v76, %v738
    %v740 = vand.u32 %v739, 4294901760
    %741 = vmatpush1.msra.mxu0 %v740
    %742 = vmatprep.subr.mxu0 0.0
    %v743 = vand.u32 %v77, 4294901760
    %v744 = vsub.f32 %v77, %v743
    %v745 = vand.u32 %v744, 4294901760
    %746 = vmatpush1.msra.mxu0 %v745
    %747 = vmatprep.subr.mxu0 0.0
    %v748 = vand.u32 %v78, 4294901760
    %v749 = vsub.f32 %v78, %v748
    %v750 = vand.u32 %v749, 4294901760
    %751 = vmatpush1.msra.mxu0 %v750
    %752 = vmatprep.subr.mxu0 0.0
    %v753 = vand.u32 %v79, 4294901760
    %v754 = vsub.f32 %v79, %v753
    %v755 = vand.u32 %v754, 4294901760
    %756 = vmatpush1.msra.mxu0 %v755
    %757 = vmatprep.subr.mxu0 0.0
    %v758 = vand.u32 %v80, 4294901760
    %v759 = vsub.f32 %v80, %v758
    %v760 = vand.u32 %v759, 4294901760
    %761 = vmatpush1.msra.mxu0 %v760
    %762 = vmatprep.subr.mxu0 0.0
    %v763 = vand.u32 %v81, 4294901760
    %v764 = vsub.f32 %v81, %v763
    %v765 = vand.u32 %v764, 4294901760
    %766 = vmatpush1.msra.mxu0 %v765
    %767 = vmatprep.subr.mxu0 0.0
    %v768 = vand.u32 %v82, 4294901760
    %v769 = vsub.f32 %v82, %v768
    %v770 = vand.u32 %v769, 4294901760
    %771 = vmatpush1.msra.mxu0 %v770
    %772 = vmatprep.subr.mxu0 0.0
    %v773 = vand.u32 %v83, 4294901760
    %v774 = vsub.f32 %v83, %v773
    %v775 = vand.u32 %v774, 4294901760
    %776 = vmatpush1.msra.mxu0 %v775
    %777 = vmatprep.subr.mxu0 0.0
    %v778 = vand.u32 %v84, 4294901760
    %v779 = vsub.f32 %v84, %v778
    %v780 = vand.u32 %v779, 4294901760
    %781 = vmatpush1.msra.mxu0 %v780
    %782 = vmatprep.subr.mxu0 0.0
    %v783 = vand.u32 %v85, 4294901760
    %v784 = vsub.f32 %v85, %v783
    %v785 = vand.u32 %v784, 4294901760
    %786 = vmatpush1.msra.mxu0 %v785
    %787 = vmatprep.subr.mxu0 0.0
    %v788 = vand.u32 %v86, 4294901760
    %v789 = vsub.f32 %v86, %v788
    %v790 = vand.u32 %v789, 4294901760
    %791 = vmatpush1.msra.mxu0 %v790
    %792 = vmatprep.subr.mxu0 0.0
    %v793 = vand.u32 %v87, 4294901760
    %v794 = vsub.f32 %v87, %v793
    %v795 = vand.u32 %v794, 4294901760
    %796 = vmatpush1.msra.mxu0 %v795
    %797 = vmatprep.subr.mxu0 0.0
    %v798 = vand.u32 %v88, 4294901760
    %v799 = vsub.f32 %v88, %v798
    %v800 = vand.u32 %v799, 4294901760
    %801 = vmatpush1.msra.mxu0 %v800
    %802 = vmatprep.subr.mxu0 0.0
    %v803 = vand.u32 %v89, 4294901760
    %v804 = vsub.f32 %v89, %v803
    %v805 = vand.u32 %v804, 4294901760
    %806 = vmatpush1.msra.mxu0 %v805
    %807 = vmatprep.subr.mxu0 0.0
    %v808 = vand.u32 %v90, 4294901760
    %v809 = vsub.f32 %v90, %v808
    %v810 = vand.u32 %v809, 4294901760
    %811 = vmatpush1.msra.mxu0 %v810
    %812 = vmatprep.subr.mxu0 0.0
    %v813 = vand.u32 %v91, 4294901760
    %v814 = vsub.f32 %v91, %v813
    %v815 = vand.u32 %v814, 4294901760
    %816 = vmatpush1.msra.mxu0 %v815
    %817 = vmatprep.subr.mxu0 0.0
    %v818 = vand.u32 %v92, 4294901760
    %v819 = vsub.f32 %v92, %v818
    %v820 = vand.u32 %v819, 4294901760
    %821 = vmatpush1.msra.mxu0 %v820
    %822 = vmatprep.subr.mxu0 0.0
    %v823 = vand.u32 %v93, 4294901760
    %v824 = vsub.f32 %v93, %v823
    %v825 = vand.u32 %v824, 4294901760
    %826 = vmatpush1.msra.mxu0 %v825
    %827 = vmatprep.subr.mxu0 0.0
    %v828 = vand.u32 %v94, 4294901760
    %v829 = vsub.f32 %v94, %v828
    %v830 = vand.u32 %v829, 4294901760
    %831 = vmatpush1.msra.mxu0 %v830
    %832 = vmatprep.subr.mxu0 0.0
    %v833 = vand.u32 %v95, 4294901760
    %v834 = vsub.f32 %v95, %v833
    %v835 = vand.u32 %v834, 4294901760
    %836 = vmatpush1.msra.mxu0 %v835
    %837 = vmatprep.subr.mxu0 0.0
    %v838 = vand.u32 %v96, 4294901760
    %v839 = vsub.f32 %v96, %v838
    %v840 = vand.u32 %v839, 4294901760
    %841 = vmatpush1.msra.mxu0 %v840
    %842 = vmatprep.subr.mxu0 0.0
    %v843 = vand.u32 %v97, 4294901760
    %v844 = vsub.f32 %v97, %v843
    %v845 = vand.u32 %v844, 4294901760
    %846 = vmatpush1.msra.mxu0 %v845
    %847 = vmatprep.subr.mxu0 0.0
    %v848 = vand.u32 %v98, 4294901760
    %v849 = vsub.f32 %v98, %v848
    %v850 = vand.u32 %v849, 4294901760
    %851 = vmatpush1.msra.mxu0 %v850
    %v852 = vand.u32 %v100, 4294901760
    %853 = vmatprep.mubr.f32.mxu0 %v852
    %v854 = vand.u32 %v66, 4294901760
    %855 = vmatmul.mubr.f32.gmra.mrb[0].mxu0 %v854
    %v856 = vpop.f32.mrb[0].mxu0
    %v857 = vadd.f32 %v689, %v856
    %v858 = vpop.f32.mrb[0].mxu0
    %859 = vdwg.mxu0
    %860 = vmatprep.subr.mxu0 0.0
    %v861 = vand.u32 %v67, 4294901760
    %862 = vmatpush1.msra.mxu0 %v861
    %863 = vmatprep.subr.mxu0 0.0
    %v864 = vand.u32 %v68, 4294901760
    %865 = vmatpush1.msra.mxu0 %v864
    %866 = vmatprep.subr.mxu0 0.0
    %v867 = vand.u32 %v69, 4294901760
    %868 = vmatpush1.msra.mxu0 %v867
    %869 = vmatprep.subr.mxu0 0.0
    %v870 = vand.u32 %v70, 4294901760
    %871 = vmatpush1.msra.mxu0 %v870
    %872 = vmatprep.subr.mxu0 0.0
    %v873 = vand.u32 %v71, 4294901760
    %874 = vmatpush1.msra.mxu0 %v873
    %875 = vmatprep.subr.mxu0 0.0
    %v876 = vand.u32 %v72, 4294901760
    %877 = vmatpush1.msra.mxu0 %v876
    %878 = vmatprep.subr.mxu0 0.0
    %v879 = vand.u32 %v73, 4294901760
    %880 = vmatpush1.msra.mxu0 %v879
    %881 = vmatprep.subr.mxu0 0.0
    %v882 = vand.u32 %v74, 4294901760
    %883 = vmatpush1.msra.mxu0 %v882
    %884 = vmatprep.subr.mxu0 0.0
    %v885 = vand.u32 %v75, 4294901760
    %886 = vmatpush1.msra.mxu0 %v885
    %887 = vmatprep.subr.mxu0 0.0
    %v888 = vand.u32 %v76, 4294901760
    %889 = vmatpush1.msra.mxu0 %v888
    %890 = vmatprep.subr.mxu0 0.0
    %v891 = vand.u32 %v77, 4294901760
    %892 = vmatpush1.msra.mxu0 %v891
    %893 = vmatprep.subr.mxu0 0.0
    %v894 = vand.u32 %v78, 4294901760
    %895 = vmatpush1.msra.mxu0 %v894
    %896 = vmatprep.subr.mxu0 0.0
    %v897 = vand.u32 %v79, 4294901760
    %898 = vmatpush1.msra.mxu0 %v897
    %899 = vmatprep.subr.mxu0 0.0
    %v900 = vand.u32 %v80, 4294901760
    %901 = vmatpush1.msra.mxu0 %v900
    %902 = vmatprep.subr.mxu0 0.0
    %v903 = vand.u32 %v81, 4294901760
    %904 = vmatpush1.msra.mxu0 %v903
    %905 = vmatprep.subr.mxu0 0.0
    %v906 = vand.u32 %v82, 4294901760
    %907 = vmatpush1.msra.mxu0 %v906
    %908 = vmatprep.subr.mxu0 0.0
    %v909 = vand.u32 %v83, 4294901760
    %910 = vmatpush1.msra.mxu0 %v909
    %911 = vmatprep.subr.mxu0 0.0
    %v912 = vand.u32 %v84, 4294901760
    %913 = vmatpush1.msra.mxu0 %v912
    %914 = vmatprep.subr.mxu0 0.0
    %v915 = vand.u32 %v85, 4294901760
    %916 = vmatpush1.msra.mxu0 %v915
    %917 = vmatprep.subr.mxu0 0.0
    %v918 = vand.u32 %v86, 4294901760
    %919 = vmatpush1.msra.mxu0 %v918
    %920 = vmatprep.subr.mxu0 0.0
    %v921 = vand.u32 %v87, 4294901760
    %922 = vmatpush1.msra.mxu0 %v921
    %923 = vmatprep.subr.mxu0 0.0
    %v924 = vand.u32 %v88, 4294901760
    %925 = vmatpush1.msra.mxu0 %v924
    %926 = vmatprep.subr.mxu0 0.0
    %v927 = vand.u32 %v89, 4294901760
    %928 = vmatpush1.msra.mxu0 %v927
    %929 = vmatprep.subr.mxu0 0.0
    %v930 = vand.u32 %v90, 4294901760
    %931 = vmatpush1.msra.mxu0 %v930
    %932 = vmatprep.subr.mxu0 0.0
    %v933 = vand.u32 %v91, 4294901760
    %934 = vmatpush1.msra.mxu0 %v933
    %935 = vmatprep.subr.mxu0 0.0
    %v936 = vand.u32 %v92, 4294901760
    %937 = vmatpush1.msra.mxu0 %v936
    %938 = vmatprep.subr.mxu0 0.0
    %v939 = vand.u32 %v93, 4294901760
    %940 = vmatpush1.msra.mxu0 %v939
    %941 = vmatprep.subr.mxu0 0.0
    %v942 = vand.u32 %v94, 4294901760
    %943 = vmatpush1.msra.mxu0 %v942
    %944 = vmatprep.subr.mxu0 0.0
    %v945 = vand.u32 %v95, 4294901760
    %946 = vmatpush1.msra.mxu0 %v945
    %947 = vmatprep.subr.mxu0 0.0
    %v948 = vand.u32 %v96, 4294901760
    %949 = vmatpush1.msra.mxu0 %v948
    %950 = vmatprep.subr.mxu0 0.0
    %v951 = vand.u32 %v97, 4294901760
    %952 = vmatpush1.msra.mxu0 %v951
    %953 = vmatprep.subr.mxu0 0.0
    %v954 = vand.u32 %v98, 4294901760
    %955 = vmatpush1.msra.mxu0 %v954
    %v956 = vand.u32 %v100, 4294901760
    %957 = vmatprep.mubr.f32.mxu0 %v956
    %v958 = vand.u32 %v66, 4294901760
    %959 = vmatmul.mubr.f32.gmra.mrb[0].mxu0 %v958
    %v960 = vpop.f32.mrb[0].mxu0
    %v961 = vadd.f32 %v857, %v960
    %v962 = vpop.f32.mrb[0].mxu0
    %963 = vdwg.mxu0
    %v964 = vrsqrt.pop %v961
    %v965 = vmul.f32 %v961, %v964
    %vm966 = vcmp.eq.f32.partialorder %v961, inf
    %v967 = vsel %vm966, %v961, %v965
    %vm968 = vcmp.eq.f32.partialorder %v961, 0.0
    %v969 = vand.u32 %v961, 2147483648
    %v970 = vsel %vm968, %v969, %v967
    %v971 = vsub.f32 0.0, %v970
    %v972 = vmul.f32 %v971, 1.442695
    %v973 = vpow.pop %v972
    %v974 = vmul.f32 %v973, 1.5
    %975 = vst [vmem:[#allocation8] sm:$0xf] %v974
    // Predicated region
    $region26: #{tpu_custom_call.1} parent=1 // pred_check
      _
    $region27: #{tpu_custom_call.1} parent=1 // pred_check_branch
      %977 = sbr.rel (0) target = $region29
    $region28: #{tpu_custom_call.1} parent=1 // pred_region
      %s979 = ssub.s32 64, 64
      %980 = vsyncadd [#allocation4], %s979
      %s982 = sshll.u32 [#allocation8], 4
      %s983 = int_to_ptr.vmem [resolvable:$true] %s982
      %985 = dma.vmem_to_hbm [thread:$0]  %s983, 64, %s3, [#allocation4]
    $region29: #{tpu_custom_call.1} parent=1 // pred_fallthru
      _
    // Predicated region
    $region30: #{tpu_custom_call.1} parent=1 // pred_check
      _
    $region31: #{tpu_custom_call.1} parent=1 // pred_check_branch
      %987 = sbr.rel (0) target = $region33
    $region32: #{tpu_custom_call.1} parent=1 // pred_region
      %988 = dma.done [#allocation4], 64
    $region33: #{tpu_custom_call.1} parent=1 // pred_fallthru
      _
    %989 = vsyncpa [#allocation3], 1
    %990 = vsyncpa [#allocation6], 1
    %991 = vsyncpa [#allocation4], 1

</llo_original>
